<compile_context>
chip_gen: v7x
topology: tpu7x:2x2x1
jax: 0.10.0
libtpu: 0.0.40
codegen_flags: <defaults>
</compile_context>

<pallas_src>
import functools

import jax
import jax.numpy as jnp
from jax.experimental import pallas as pl
from jax.experimental.pallas import tpu as pltpu


_LANES = 512  # lane width of each batch row-group (multiple of 128)


def _round_up(n: int, m: int) -> int:
    return ((n + m - 1) // m) * m


def _mlp_kernel(w1_ref, b1_ref, w23_ref, b23_ref, x_ref, o_ref):
    """One batch tile, feature-major 3-D layout.

    x_ref : (4, tb_rows, LANES) VMEM -- full (8,128)-tiled slab per input feature
    o_ref : (2, tb_rows, LANES) VMEM
    w1_ref (4,3), b1_ref (3,), w23_ref (3,2), b23_ref (2,) : SMEM scalar tables.
    """
    x = [x_ref[k] for k in range(4)]            # each (tb_rows, LANES)

    # layer1 + ReLU: 4 -> 3   (scalar-broadcast VPU FMAs, no MXU round trip)
    h1 = []
    for j in range(3):
        acc = x[0] * w1_ref[0, j]
        for k in range(1, 4):
            acc = acc + x[k] * w1_ref[k, j]
        h1.append(jnp.maximum(acc + b1_ref[j], 0.0))

    # layer2 folded into layer3 (no activation in between) + final ReLU: 3 -> 2
    for j in range(2):
        acc = h1[0] * w23_ref[0, j]
        for k in range(1, 3):
            acc = acc + h1[k] * w23_ref[k, j]
        # direct per-row, lane-dense store (no concatenate / relayout)
        o_ref[j, :, :] = jnp.maximum(acc + b23_ref[j], 0.0).astype(o_ref.dtype)


@functools.partial(jax.jit, static_argnames=("block_elems",))
def _forward_pallas(x, w1, b1, w2, b2, w3, b3, *, block_elems: int):
    B = x.shape[0]
    L = _LANES

    # Fold the activation-free layer2 into layer3:
    #   (x@w2 + b2) @ w3 + b3  ==  x @ (w2@w3) + (b2@w3 + b3)
    w23 = (w2 @ w3).astype(jnp.float32)          # (3, 2)
    b23 = (b2 @ w3 + b3).astype(jnp.float32)     # (2,)

    # Feature-major, 3-D lane-dense layout: batch split into L-wide lane groups so
    # each per-feature slab is a full (8,128)-tiled block.
    b_pad = _round_up(B, L)
    rows = b_pad // L
    x_fm = x.T                                           # (4, B)
    if b_pad != B:
        x_fm = jnp.pad(x_fm, ((0, 0), (0, b_pad - B)))   # pad tail lane group only
    x_fm = x_fm.reshape(4, rows, L)

    # Row-tile: large enough to amortize per-grid-step overhead (~block_elems elements
    # per feature per step), multiple of 8 sublanes, capped so the grid has >=2 steps
    # whenever possible (v7x megacore split). Pallas masks the partial final block.
    if rows <= 8:
        tb_rows = rows                                   # single full-extent block
    else:
        tb_rows = max(8, (block_elems // L) // 8 * 8)
        tb_rows = min(tb_rows, _round_up(pl.cdiv(rows, 2), 8))
    n_blocks = pl.cdiv(rows, tb_rows)

    smem = pl.BlockSpec(memory_space=pltpu.MemorySpace.SMEM)
    out_fm = pl.pallas_call(
        _mlp_kernel,
        out_shape=jax.ShapeDtypeStruct((2, rows, L), x.dtype),
        grid=(n_blocks,),
        in_specs=[
            smem,                                             # w1  (4,3)
            smem,                                             # b1  (3,)
            smem,                                             # w23 (3,2)
            smem,                                             # b23 (2,)
            pl.BlockSpec((4, tb_rows, L), lambda i: (0, i, 0)),   # x slab
        ],
        out_specs=pl.BlockSpec((2, tb_rows, L), lambda i: (0, i, 0)),
        compiler_params=pltpu.CompilerParams(
            dimension_semantics=("parallel",),     # batch tiles split across TCs (v7x)
            vmem_limit_bytes=32 * 1024 * 1024,     # ~12.6 MiB used at the default tile
        ),
    )(w1, b1, w23, b23, x_fm)

    # TODO(synk): if the surrounding model can accept feature-major (4,B)/(2,B) I/O,
    # delete these transposes to remove the last wrapper-side HBM round trip.
    return out_fm.reshape(2, b_pad)[:, :B].T               # (B, 2)


def simple_forward_pass(x, w1, b1, w2, b2, w3, b3, *, block_elems=256 * 1024,
                        use_pallas=None):
    """x: (B, 4) float32; weights stored as (in, out); biases 1-D (out,).

    For tiny batches the pallas_call launch/DMA setup dominates the few hundred FLOPs,
    so by default the Pallas path is used only above a batch threshold; `use_pallas=True`
    forces the kernel.
    """
    B = x.shape[0]
    if use_pallas is None:
        use_pallas = B >= 512
    if not use_pallas:
        return reference_forward(x, w1, b1, w2, b2, w3, b3)
    return _forward_pallas(x, w1, b1, w2, b2, w3, b3, block_elems=block_elems)


def init_params(key):
    """Deterministic init matching the PyTorch layer shapes.

    PyTorch stores Linear weights as (out, in); we store the transpose (in, out)
    so forward is plain x @ W + b.
    """
    k1, k2, k3, k4, k5, k6 = jax.random.split(key, 6)
    w1 = jax.random.uniform(k1, (4, 3), jnp.float32, -0.5, 0.5)   # Linear(4, 3)
    b1 = jax.random.uniform(k2, (3,), jnp.float32, -0.5, 0.5)
    w2 = jax.random.uniform(k3, (3, 4), jnp.float32, -0.5, 0.5)   # Linear(3, 4)
    b2 = jax.random.uniform(k4, (4,), jnp.float32, -0.5, 0.5)
    w3 = jax.random.uniform(k5, (4, 2), jnp.float32, -0.5, 0.5)   # Linear(4, 2)
    b3 = jax.random.uniform(k6, (2,), jnp.float32, -0.5, 0.5)
    return w1, b1, w2, b2, w3, b3


def reference_forward(x, w1, b1, w2, b2, w3, b3):
    h1 = jnp.maximum(x @ w1 + b1, 0.0)
    h2 = h1 @ w2 + b2
    return jnp.maximum(h2 @ w3 + b3, 0.0)


if __name__ == "__main__":
    key = jax.random.PRNGKey(0)
    kx1, kx2, kp = jax.random.split(key, 3)
    params = init_params(kp)

    # Case 1: small batch (module-spec scale), Pallas path forced.
    # Single 512-lane row group (rows=1), exercises tail padding.
    x_small = jax.random.normal(kx1, (8, 4), jnp.float32)
    out_small = jax.block_until_ready(
        simple_forward_pass(x_small, *params, use_pallas=True))
    ref_small = reference_forward(x_small, *params)
    assert out_small.shape == (8, 2), out_small.shape
    assert jnp.allclose(out_small, ref_small, atol=1e-5, rtol=1e-5), \
        "small-batch mismatch vs pure-JAX reference"

    # Case 2: larger batch -> rows=9, tb_rows=8, 2 grid steps (partial final block),
    # pipelined and split across TensorCores on v7x.
    x_large = jax.random.normal(kx2, (4500, 4), jnp.float32)
    out_large = jax.block_until_ready(
        simple_forward_pass(x_large, *params, use_pallas=True))
    ref_large = reference_forward(x_large, *params)
    assert out_large.shape == (4500, 2), out_large.shape
    assert jnp.allclose(out_large, ref_large, atol=1e-5, rtol=1e-5), \
        "large-batch mismatch vs pure-JAX reference"

    # Case 3: default dispatcher falls back to fused XLA for tiny batches.
    out_auto = jax.block_until_ready(simple_forward_pass(x_small, *params))
    assert jnp.allclose(out_auto, ref_small, atol=1e-5, rtol=1e-5)

    print("KERNEL_OK")
</pallas_src>

<mosaic_0001>
module attributes {stable_mosaic.version = 11 : i64} {
  func.func @_mlp_kernel(%arg0: i32, %arg1: memref<4x3xf32, #tpu.memory_space<smem>>, %arg2: memref<3xf32, #tpu.memory_space<smem>>, %arg3: memref<3x2xf32, #tpu.memory_space<smem>>, %arg4: memref<2xf32, #tpu.memory_space<smem>>, %arg5: memref<4x1x512xf32, #tpu.memory_space<vmem>>, %arg6: memref<2x1x512xf32, #tpu.memory_space<vmem>>) attributes {dimension_semantics = [#tpu.dimension_semantics<parallel>], iteration_bounds = array<i64: 1>, scalar_prefetch = 0 : i64, scratch_operands = 0 : i64, tpu.core_type = #tpu.core_type<tc>, window_params = [{transform_indices = @transform_0, window_bounds = array<i64: 4, 3>}, {transform_indices = @transform_1, window_bounds = array<i64: 3>}, {transform_indices = @transform_2, window_bounds = array<i64: 3, 2>}, {transform_indices = @transform_3, window_bounds = array<i64: 2>}, {transform_indices = @transform_4, window_bounds = array<i64: 4, 1, 512>}, {transform_indices = @transform_5, window_bounds = array<i64: 2, 1, 512>}]} {
    %c0 = arith.constant 0 : index
    %c0_0 = arith.constant 0 : index
    %c0_1 = arith.constant 0 : index
    %0 = vector.load %arg5[%c0, %c0_0, %c0_1] : memref<4x1x512xf32, #tpu.memory_space<vmem>>, vector<1x1x512xf32>
    %1 = vector.shape_cast %0 : vector<1x1x512xf32> to vector<1x512xf32>
    %c1 = arith.constant 1 : index
    %c0_2 = arith.constant 0 : index
    %c0_3 = arith.constant 0 : index
    %2 = vector.load %arg5[%c1, %c0_2, %c0_3] : memref<4x1x512xf32, #tpu.memory_space<vmem>>, vector<1x1x512xf32>
    %3 = vector.shape_cast %2 : vector<1x1x512xf32> to vector<1x512xf32>
    %c2 = arith.constant 2 : index
    %c0_4 = arith.constant 0 : index
    %c0_5 = arith.constant 0 : index
    %4 = vector.load %arg5[%c2, %c0_4, %c0_5] : memref<4x1x512xf32, #tpu.memory_space<vmem>>, vector<1x1x512xf32>
    %5 = vector.shape_cast %4 : vector<1x1x512xf32> to vector<1x512xf32>
    %c3 = arith.constant 3 : index
    %c0_6 = arith.constant 0 : index
    %c0_7 = arith.constant 0 : index
    %6 = vector.load %arg5[%c3, %c0_6, %c0_7] : memref<4x1x512xf32, #tpu.memory_space<vmem>>, vector<1x1x512xf32>
    %7 = vector.shape_cast %6 : vector<1x1x512xf32> to vector<1x512xf32>
    %c0_8 = arith.constant 0 : index
    %c0_9 = arith.constant 0 : index
    %8 = memref.load %arg1[%c0_8, %c0_9] : memref<4x3xf32, #tpu.memory_space<smem>>
    %9 = vector.broadcast %8 : f32 to vector<1x512xf32>
    %10 = arith.mulf %1, %9 : vector<1x512xf32>
    %c1_10 = arith.constant 1 : index
    %c0_11 = arith.constant 0 : index
    %11 = memref.load %arg1[%c1_10, %c0_11] : memref<4x3xf32, #tpu.memory_space<smem>>
    %12 = vector.broadcast %11 : f32 to vector<1x512xf32>
    %13 = arith.mulf %3, %12 : vector<1x512xf32>
    %14 = arith.addf %10, %13 : vector<1x512xf32>
    %c2_12 = arith.constant 2 : index
    %c0_13 = arith.constant 0 : index
    %15 = memref.load %arg1[%c2_12, %c0_13] : memref<4x3xf32, #tpu.memory_space<smem>>
    %16 = vector.broadcast %15 : f32 to vector<1x512xf32>
    %17 = arith.mulf %5, %16 : vector<1x512xf32>
    %18 = arith.addf %14, %17 : vector<1x512xf32>
    %c3_14 = arith.constant 3 : index
    %c0_15 = arith.constant 0 : index
    %19 = memref.load %arg1[%c3_14, %c0_15] : memref<4x3xf32, #tpu.memory_space<smem>>
    %20 = vector.broadcast %19 : f32 to vector<1x512xf32>
    %21 = arith.mulf %7, %20 : vector<1x512xf32>
    %22 = arith.addf %18, %21 : vector<1x512xf32>
    %c0_16 = arith.constant 0 : index
    %23 = memref.load %arg2[%c0_16] : memref<3xf32, #tpu.memory_space<smem>>
    %24 = vector.broadcast %23 : f32 to vector<1x512xf32>
    %25 = arith.addf %22, %24 : vector<1x512xf32>
    %cst = arith.constant 0.000000e+00 : f32
    %26 = vector.broadcast %cst : f32 to vector<1x512xf32>
    %27 = arith.maximumf %25, %26 : vector<1x512xf32>
    %c0_17 = arith.constant 0 : index
    %c1_18 = arith.constant 1 : index
    %28 = memref.load %arg1[%c0_17, %c1_18] : memref<4x3xf32, #tpu.memory_space<smem>>
    %29 = vector.broadcast %28 : f32 to vector<1x512xf32>
    %30 = arith.mulf %1, %29 : vector<1x512xf32>
    %c1_19 = arith.constant 1 : index
    %c1_20 = arith.constant 1 : index
    %31 = memref.load %arg1[%c1_19, %c1_20] : memref<4x3xf32, #tpu.memory_space<smem>>
    %32 = vector.broadcast %31 : f32 to vector<1x512xf32>
    %33 = arith.mulf %3, %32 : vector<1x512xf32>
    %34 = arith.addf %30, %33 : vector<1x512xf32>
    %c2_21 = arith.constant 2 : index
    %c1_22 = arith.constant 1 : index
    %35 = memref.load %arg1[%c2_21, %c1_22] : memref<4x3xf32, #tpu.memory_space<smem>>
    %36 = vector.broadcast %35 : f32 to vector<1x512xf32>
    %37 = arith.mulf %5, %36 : vector<1x512xf32>
    %38 = arith.addf %34, %37 : vector<1x512xf32>
    %c3_23 = arith.constant 3 : index
    %c1_24 = arith.constant 1 : index
    %39 = memref.load %arg1[%c3_23, %c1_24] : memref<4x3xf32, #tpu.memory_space<smem>>
    %40 = vector.broadcast %39 : f32 to vector<1x512xf32>
    %41 = arith.mulf %7, %40 : vector<1x512xf32>
    %42 = arith.addf %38, %41 : vector<1x512xf32>
    %c1_25 = arith.constant 1 : index
    %43 = memref.load %arg2[%c1_25] : memref<3xf32, #tpu.memory_space<smem>>
    %44 = vector.broadcast %43 : f32 to vector<1x512xf32>
    %45 = arith.addf %42, %44 : vector<1x512xf32>
    %cst_26 = arith.constant 0.000000e+00 : f32
    %46 = vector.broadcast %cst_26 : f32 to vector<1x512xf32>
    %47 = arith.maximumf %45, %46 : vector<1x512xf32>
    %c0_27 = arith.constant 0 : index
    %c2_28 = arith.constant 2 : index
    %48 = memref.load %arg1[%c0_27, %c2_28] : memref<4x3xf32, #tpu.memory_space<smem>>
    %49 = vector.broadcast %48 : f32 to vector<1x512xf32>
    %50 = arith.mulf %1, %49 : vector<1x512xf32>
    %c1_29 = arith.constant 1 : index
    %c2_30 = arith.constant 2 : index
    %51 = memref.load %arg1[%c1_29, %c2_30] : memref<4x3xf32, #tpu.memory_space<smem>>
    %52 = vector.broadcast %51 : f32 to vector<1x512xf32>
    %53 = arith.mulf %3, %52 : vector<1x512xf32>
    %54 = arith.addf %50, %53 : vector<1x512xf32>
    %c2_31 = arith.constant 2 : index
    %c2_32 = arith.constant 2 : index
    %55 = memref.load %arg1[%c2_31, %c2_32] : memref<4x3xf32, #tpu.memory_space<smem>>
    %56 = vector.broadcast %55 : f32 to vector<1x512xf32>
    %57 = arith.mulf %5, %56 : vector<1x512xf32>
    %58 = arith.addf %54, %57 : vector<1x512xf32>
    %c3_33 = arith.constant 3 : index
    %c2_34 = arith.constant 2 : index
    %59 = memref.load %arg1[%c3_33, %c2_34] : memref<4x3xf32, #tpu.memory_space<smem>>
    %60 = vector.broadcast %59 : f32 to vector<1x512xf32>
    %61 = arith.mulf %7, %60 : vector<1x512xf32>
    %62 = arith.addf %58, %61 : vector<1x512xf32>
    %c2_35 = arith.constant 2 : index
    %63 = memref.load %arg2[%c2_35] : memref<3xf32, #tpu.memory_space<smem>>
    %64 = vector.broadcast %63 : f32 to vector<1x512xf32>
    %65 = arith.addf %62, %64 : vector<1x512xf32>
    %cst_36 = arith.constant 0.000000e+00 : f32
    %66 = vector.broadcast %cst_36 : f32 to vector<1x512xf32>
    %67 = arith.maximumf %65, %66 : vector<1x512xf32>
    %c0_37 = arith.constant 0 : index
    %c0_38 = arith.constant 0 : index
    %68 = memref.load %arg3[%c0_37, %c0_38] : memref<3x2xf32, #tpu.memory_space<smem>>
    %69 = vector.broadcast %68 : f32 to vector<1x512xf32>
    %70 = arith.mulf %27, %69 : vector<1x512xf32>
    %c1_39 = arith.constant 1 : index
    %c0_40 = arith.constant 0 : index
    %71 = memref.load %arg3[%c1_39, %c0_40] : memref<3x2xf32, #tpu.memory_space<smem>>
    %72 = vector.broadcast %71 : f32 to vector<1x512xf32>
    %73 = arith.mulf %47, %72 : vector<1x512xf32>
    %74 = arith.addf %70, %73 : vector<1x512xf32>
    %c2_41 = arith.constant 2 : index
    %c0_42 = arith.constant 0 : index
    %75 = memref.load %arg3[%c2_41, %c0_42] : memref<3x2xf32, #tpu.memory_space<smem>>
    %76 = vector.broadcast %75 : f32 to vector<1x512xf32>
    %77 = arith.mulf %67, %76 : vector<1x512xf32>
    %78 = arith.addf %74, %77 : vector<1x512xf32>
    %c0_43 = arith.constant 0 : index
    %79 = memref.load %arg4[%c0_43] : memref<2xf32, #tpu.memory_space<smem>>
    %80 = vector.broadcast %79 : f32 to vector<1x512xf32>
    %81 = arith.addf %78, %80 : vector<1x512xf32>
    %cst_44 = arith.constant 0.000000e+00 : f32
    %82 = vector.broadcast %cst_44 : f32 to vector<1x512xf32>
    %83 = arith.maximumf %81, %82 : vector<1x512xf32>
    %c0_45 = arith.constant 0 : index
    %c0_46 = arith.constant 0 : index
    %c0_47 = arith.constant 0 : index
    %84 = vector.load %arg6[%c0_45, %c0_46, %c0_47] : memref<2x1x512xf32, #tpu.memory_space<vmem>>, vector<1x1x512xf32>
    %85 = vector.shape_cast %84 : vector<1x1x512xf32> to vector<1x512xf32>
    %86 = vector.shape_cast %83 : vector<1x512xf32> to vector<1x1x512xf32>
    tpu.vector_store %arg6[%c0_45, %c0_46, %c0_47], %86 {strides = array<i32>} : memref<2x1x512xf32, #tpu.memory_space<vmem>>, vector<1x1x512xf32>,
    %c0_48 = arith.constant 0 : index
    %c1_49 = arith.constant 1 : index
    %87 = memref.load %arg3[%c0_48, %c1_49] : memref<3x2xf32, #tpu.memory_space<smem>>
    %88 = vector.broadcast %87 : f32 to vector<1x512xf32>
    %89 = arith.mulf %27, %88 : vector<1x512xf32>
    %c1_50 = arith.constant 1 : index
    %c1_51 = arith.constant 1 : index
    %90 = memref.load %arg3[%c1_50, %c1_51] : memref<3x2xf32, #tpu.memory_space<smem>>
    %91 = vector.broadcast %90 : f32 to vector<1x512xf32>
    %92 = arith.mulf %47, %91 : vector<1x512xf32>
    %93 = arith.addf %89, %92 : vector<1x512xf32>
    %c2_52 = arith.constant 2 : index
    %c1_53 = arith.constant 1 : index
    %94 = memref.load %arg3[%c2_52, %c1_53] : memref<3x2xf32, #tpu.memory_space<smem>>
    %95 = vector.broadcast %94 : f32 to vector<1x512xf32>
    %96 = arith.mulf %67, %95 : vector<1x512xf32>
    %97 = arith.addf %93, %96 : vector<1x512xf32>
    %c1_54 = arith.constant 1 : index
    %98 = memref.load %arg4[%c1_54] : memref<2xf32, #tpu.memory_space<smem>>
    %99 = vector.broadcast %98 : f32 to vector<1x512xf32>
    %100 = arith.addf %97, %99 : vector<1x512xf32>
    %cst_55 = arith.constant 0.000000e+00 : f32
    %101 = vector.broadcast %cst_55 : f32 to vector<1x512xf32>
    %102 = arith.maximumf %100, %101 : vector<1x512xf32>
    %c1_56 = arith.constant 1 : index
    %c0_57 = arith.constant 0 : index
    %c0_58 = arith.constant 0 : index
    %103 = vector.load %arg6[%c1_56, %c0_57, %c0_58] : memref<2x1x512xf32, #tpu.memory_space<vmem>>, vector<1x1x512xf32>
    %104 = vector.shape_cast %103 : vector<1x1x512xf32> to vector<1x512xf32>
    %105 = vector.shape_cast %102 : vector<1x512xf32> to vector<1x1x512xf32>
    tpu.vector_store %arg6[%c1_56, %c0_57, %c0_58], %105 {strides = array<i32>} : memref<2x1x512xf32, #tpu.memory_space<vmem>>, vector<1x1x512xf32>,
    return
  }
  func.func @transform_0(%arg0: i32) -> (i32, i32) {
    %c0_i32 = arith.constant 0 : i32
    %c0_i32_0 = arith.constant 0 : i32
    %c0_i32_1 = arith.constant 0 : i32
    return %c0_i32, %c0_i32_0 : i32, i32
  }
  func.func @transform_1(%arg0: i32) -> i32 {
    %c0_i32 = arith.constant 0 : i32
    %c0_i32_0 = arith.constant 0 : i32
    return %c0_i32 : i32
  }
  func.func @transform_2(%arg0: i32) -> (i32, i32) {
    %c0_i32 = arith.constant 0 : i32
    %c0_i32_0 = arith.constant 0 : i32
    %c0_i32_1 = arith.constant 0 : i32
    return %c0_i32, %c0_i32_0 : i32, i32
  }
  func.func @transform_3(%arg0: i32) -> i32 {
    %c0_i32 = arith.constant 0 : i32
    %c0_i32_0 = arith.constant 0 : i32
    return %c0_i32 : i32
  }
  func.func @transform_4(%arg0: i32) -> (i32, i32, i32) {
    %c0_i32 = arith.constant 0 : i32
    %c0_i32_0 = arith.constant 0 : i32
    %c0_i32_1 = arith.constant 0 : i32
    return %c0_i32, %arg0, %c0_i32_0 : i32, i32, i32
  }
  func.func @transform_5(%arg0: i32) -> (i32, i32, i32) {
    %c0_i32 = arith.constant 0 : i32
    %c0_i32_0 = arith.constant 0 : i32
    %c0_i32_1 = arith.constant 0 : i32
    return %c0_i32, %arg0, %c0_i32_0 : i32, i32, i32
  }
}

</mosaic_0001>

<llo_original>
// kernel: _forward_pallas.1
$region0: #{_forward_pallas.1}
  #allocation0 [shape = 'u32[]', space=smem, size = 0x4, offset = 0x4, fixed_abs, tag = 'smem constant byte address 0x4 - core index']
  #allocation1 [shape = 'u32[144,128]{1,0:T(1,128)}', space=vmem, size = 0x12000, scoped, tag = 'internal scratch']
  %s0 = inlined_call_operand.vmem [shape: f32[4,3], index: 0, kind: input, shape index: {}]
  %s1 = inlined_call_operand.vmem [shape: f32[3], index: 1, kind: input, shape index: {}]
  %s2 = inlined_call_operand.vmem [shape: f32[3,2], index: 2, kind: input, shape index: {}]
  %s3 = inlined_call_operand.vmem [shape: f32[2], index: 3, kind: input, shape index: {}]
  %s4 = inlined_call_operand.vmem [shape: f32[4,1,512], index: 4, kind: input, shape index: {}]
  %s5 = inlined_call_operand.vmem [shape: f32[2,1,512], index: 5, kind: output, shape index: {}]
  %s6 = sld [smem:[#allocation0]]
  $region46: #{_forward_pallas.1} parent=0
    _
  %s8 = ssub.s32 1, %s6
  %s9 = scalar_select 0, %s8, %s6
  $region1: #{_forward_pallas.1} parent=0
    #allocation2 [shape = 'u8[2048]{0}', space=smem, size = 0x800, scoped, tag = 'input window, operand 0, single buffered']
    #allocation3 [shape = 's32[1]{0}', space=sflag, size = 0x4, scoped, tag = 'scoped memory for _forward_pallas.1']
    #allocation4 [shape = 'u8[512]{0}', space=smem, size = 0x200, scoped, tag = 'input window, operand 1, single buffered']
    #allocation5 [shape = 's32[1]{0}', space=sflag, size = 0x4, scoped, tag = 'scoped memory for _forward_pallas.1']
    #allocation6 [shape = 'u8[2048]{0}', space=smem, size = 0x800, scoped, tag = 'input window, operand 2, single buffered']
    #allocation7 [shape = 'u8[512]{0}', space=smem, size = 0x200, scoped, tag = 'input window, operand 3, single buffered']
    #allocation8 [shape = 's32[1]{0}', space=sflag, size = 0x4, scoped, tag = 'scoped memory for _forward_pallas.1']
    %10 = vsyncpa [#allocation3], 0
    %11 = vsyncpa [#allocation5], 0
    %12 = vsyncpa [#allocation8], 0
    // Predicated region
    $region2: #{_forward_pallas.1} parent=1 // pred_check
      _
    $region3: #{_forward_pallas.1} parent=1 // pred_check_branch
      %14 = sbr.rel (0) target = $region5
    $region4: #{_forward_pallas.1} parent=1 // pred_region
      %s16 = ssub.s32 64, 64
      %17 = vsyncadd [#allocation3], %s16
      %s19 = sshll.u32 %s0, 4
      %s20 = int_to_ptr.vmem [resolvable:$true] %s19
      %22 = dma.vmem_to_smem %s20, 64, [#allocation2], [#allocation3]
    $region5: #{_forward_pallas.1} parent=1 // pred_fallthru
      _
    // Predicated region
    $region6: #{_forward_pallas.1} parent=1 // pred_check
      _
    $region7: #{_forward_pallas.1} parent=1 // pred_check_branch
      %24 = sbr.rel (0) target = $region9
    $region8: #{_forward_pallas.1} parent=1 // pred_region
      %s26 = ssub.s32 16, 16
      %27 = vsyncadd [#allocation5], %s26
      %s29 = sshll.u32 %s1, 4
      %s30 = int_to_ptr.vmem [resolvable:$true] %s29
      %32 = dma.vmem_to_smem %s30, 16, [#allocation4], [#allocation5]
    $region9: #{_forward_pallas.1} parent=1 // pred_fallthru
      _
    // Predicated region
    $region10: #{_forward_pallas.1} parent=1 // pred_check
      _
    $region11: #{_forward_pallas.1} parent=1 // pred_check_branch
      %34 = sbr.rel (0) target = $region13
    $region12: #{_forward_pallas.1} parent=1 // pred_region
      %s36 = ssub.s32 64, 64
      %37 = vsyncadd [#allocation5], %s36
      %s39 = sshll.u32 %s2, 4
      %s40 = int_to_ptr.vmem [resolvable:$true] %s39
      %42 = dma.vmem_to_smem %s40, 64, [#allocation6], [#allocation5]
    $region13: #{_forward_pallas.1} parent=1 // pred_fallthru
      _
    // Predicated region
    $region14: #{_forward_pallas.1} parent=1 // pred_check
      _
    $region15: #{_forward_pallas.1} parent=1 // pred_check_branch
      %44 = sbr.rel (0) target = $region17
    $region16: #{_forward_pallas.1} parent=1 // pred_region
      %s46 = ssub.s32 16, 16
      %47 = vsyncadd [#allocation8], %s46
      %s49 = sshll.u32 %s3, 4
      %s50 = int_to_ptr.vmem [resolvable:$true] %s49
      %52 = dma.vmem_to_smem %s50, 16, [#allocation7], [#allocation8]
    $region17: #{_forward_pallas.1} parent=1 // pred_fallthru
      _
    // Predicated region
    $region18: #{_forward_pallas.1} parent=1 // pred_check
      _
    $region19: #{_forward_pallas.1} parent=1 // pred_check_branch
      %54 = sbr.rel (0) target = $region21
    $region20: #{_forward_pallas.1} parent=1 // pred_region
      _
    $region21: #{_forward_pallas.1} parent=1 // pred_fallthru
      _
    // Predicated region
    $region22: #{_forward_pallas.1} parent=1 // pred_check
      _
    $region23: #{_forward_pallas.1} parent=1 // pred_check_branch
      %56 = sbr.rel (0) target = $region25
    $region24: #{_forward_pallas.1} parent=1 // pred_region
      %57 = dma.done [#allocation3], 64
    $region25: #{_forward_pallas.1} parent=1 // pred_fallthru
      _
    // Predicated region
    $region26: #{_forward_pallas.1} parent=1 // pred_check
      _
    $region27: #{_forward_pallas.1} parent=1 // pred_check_branch
      %59 = sbr.rel (0) target = $region29
    $region28: #{_forward_pallas.1} parent=1 // pred_region
      %60 = dma.done [#allocation5], 16
    $region29: #{_forward_pallas.1} parent=1 // pred_fallthru
      _
    // Predicated region
    $region30: #{_forward_pallas.1} parent=1 // pred_check
      _
    $region31: #{_forward_pallas.1} parent=1 // pred_check_branch
      %62 = sbr.rel (0) target = $region33
    $region32: #{_forward_pallas.1} parent=1 // pred_region
      %63 = dma.done [#allocation5], 64
    $region33: #{_forward_pallas.1} parent=1 // pred_fallthru
      _
    // Predicated region
    $region34: #{_forward_pallas.1} parent=1 // pred_check
      _
    $region35: #{_forward_pallas.1} parent=1 // pred_check_branch
      %65 = sbr.rel (0) target = $region37
    $region36: #{_forward_pallas.1} parent=1 // pred_region
      %66 = dma.done [#allocation8], 16
    $region37: #{_forward_pallas.1} parent=1 // pred_fallthru
      _
    %67 = sfence
    %v68 = vld [vmem:[%s4] sm:$0xf]
    %s69 = scalar_lea.vmem %s4, 4
    %v70 = vld [vmem:[%s69] sm:$0xf]
    %s71 = scalar_lea.vmem %s4, 8
    %v72 = vld [vmem:[%s71] sm:$0xf]
    %s73 = scalar_lea.vmem %s4, 12
    %v74 = vld [vmem:[%s73] sm:$0xf]
    %s75 = sld [smem:[#allocation2]]
    %v76 = vstv %s75
    %v77 = vmul.f32 %v68, %v76
    %s78 = sld [smem:[#allocation2 + $0x80]]
    %v79 = vstv %s78
    %v80 = vmul.f32 %v70, %v79
    %v81 = vadd.f32 %v77, %v80
    %s82 = sld [smem:[#allocation2 + $0x100]]
    %v83 = vstv %s82
    %v84 = vmul.f32 %v72, %v83
    %v85 = vadd.f32 %v81, %v84
    %s86 = sld [smem:[#allocation2 + $0x180]]
    %v87 = vstv %s86
    %v88 = vmul.f32 %v74, %v87
    %v89 = vadd.f32 %v85, %v88
    %s90 = sld [smem:[#allocation4]]
    %v91 = vstv %s90
    %v92 = vadd.f32 %v89, %v91
    %v93 = vmax.f32 %v92, 0.0
    %s94 = sld [smem:[#allocation2 + $0x1]]
    %v95 = vstv %s94
    %v96 = vmul.f32 %v68, %v95
    %s97 = sld [smem:[#allocation2 + $0x81]]
    %v98 = vstv %s97
    %v99 = vmul.f32 %v70, %v98
    %v100 = vadd.f32 %v96, %v99
    %s101 = sld [smem:[#allocation2 + $0x101]]
    %v102 = vstv %s101
    %v103 = vmul.f32 %v72, %v102
    %v104 = vadd.f32 %v100, %v103
    %s105 = sld [smem:[#allocation2 + $0x181]]
    %v106 = vstv %s105
    %v107 = vmul.f32 %v74, %v106
    %v108 = vadd.f32 %v104, %v107
    %s109 = sld [smem:[#allocation4 + $0x1]]
    %v110 = vstv %s109
    %v111 = vadd.f32 %v108, %v110
    %v112 = vmax.f32 %v111, 0.0
    %s113 = sld [smem:[#allocation2 + $0x2]]
    %v114 = vstv %s113
    %v115 = vmul.f32 %v68, %v114
    %s116 = sld [smem:[#allocation2 + $0x82]]
    %v117 = vstv %s116
    %v118 = vmul.f32 %v70, %v117
    %v119 = vadd.f32 %v115, %v118
    %s120 = sld [smem:[#allocation2 + $0x102]]
    %v121 = vstv %s120
    %v122 = vmul.f32 %v72, %v121
    %v123 = vadd.f32 %v119, %v122
    %s124 = sld [smem:[#allocation2 + $0x182]]
    %v125 = vstv %s124
    %v126 = vmul.f32 %v74, %v125
    %v127 = vadd.f32 %v123, %v126
    %s128 = sld [smem:[#allocation4 + $0x2]]
    %v129 = vstv %s128
    %v130 = vadd.f32 %v127, %v129
    %v131 = vmax.f32 %v130, 0.0
    %s132 = sld [smem:[#allocation6]]
    %v133 = vstv %s132
    %v134 = vmul.f32 %v93, %v133
    %s135 = sld [smem:[#allocation6 + $0x80]]
    %v136 = vstv %s135
    %v137 = vmul.f32 %v112, %v136
    %v138 = vadd.f32 %v134, %v137
    %s139 = sld [smem:[#allocation6 + $0x100]]
    %v140 = vstv %s139
    %v141 = vmul.f32 %v131, %v140
    %v142 = vadd.f32 %v138, %v141
    %s143 = sld [smem:[#allocation7]]
    %v144 = vstv %s143
    %v145 = vadd.f32 %v142, %v144
    %v146 = vmax.f32 %v145, 0.0
    %v147 = vlaneseq
    %vm148 = vcmp.ge.s32.totalorder %v147, 0
    %vm149 = vcmp.lt.s32.totalorder %v147, 512
    %vm150 = vmand %vm148, %vm149
    %151 = vst.msk [vmem:[%s5] sm:$0xf] %vm150, %v146
    %s152 = sld [smem:[#allocation6 + $0x1]]
    %v153 = vstv %s152
    %v154 = vmul.f32 %v93, %v153
    %s155 = sld [smem:[#allocation6 + $0x81]]
    %v156 = vstv %s155
    %v157 = vmul.f32 %v112, %v156
    %v158 = vadd.f32 %v154, %v157
    %s159 = sld [smem:[#allocation6 + $0x101]]
    %v160 = vstv %s159
    %v161 = vmul.f32 %v131, %v160
    %v162 = vadd.f32 %v158, %v161
    %s163 = sld [smem:[#allocation7 + $0x1]]
    %v164 = vstv %s163
    %v165 = vadd.f32 %v162, %v164
    %v166 = vmax.f32 %v165, 0.0
    %s167 = scalar_lea.vmem %s5, 4
    %168 = vst.msk [vmem:[%s167] sm:$0xf] %vm150, %v166
    // Predicated region
    $region38: #{_forward_pallas.1} parent=1 // pred_check
      _
    $region39: #{_forward_pallas.1} parent=1 // pred_check_branch
      %170 = sbr.rel (0) target = $region41
    $region40: #{_forward_pallas.1} parent=1 // pred_region
      _
    $region41: #{_forward_pallas.1} parent=1 // pred_fallthru
      _
    // Predicated region
    $region42: #{_forward_pallas.1} parent=1 // pred_check
      _
    $region43: #{_forward_pallas.1} parent=1 // pred_check_branch
      %172 = sbr.rel (0) target = $region45
    $region44: #{_forward_pallas.1} parent=1 // pred_region
      _
    $region45: #{_forward_pallas.1} parent=1 // pred_fallthru
      _
    %173 = vsyncpa [#allocation3], 1
    %174 = vsyncpa [#allocation5], 1
    %175 = vsyncpa [#allocation8], 1

</llo_original>
